<compile_context>
chip_gen: v5e
topology: v5e:2x2
jax: 0.10.0
libtpu: 0.0.40
codegen_flags: <defaults>
</compile_context>

<pallas_src>
import jax
import jax.numpy as jnp
from jax.experimental import pallas as pl
from jax.experimental.pallas import tpu as pltpu


def _round_up(n, m):
    return ((n + m - 1) // m) * m


def _netg_kernel(x_ref, w1_ref, b1_ref, w2_ref, b2_ref, w3_ref, b3_ref, o_ref):
    # One (bm, nz) batch tile through the whole MLP. Weights/biases are
    # VMEM-resident (constant index_map), read once per grid step.
    x = x_ref[...]
    h1 = jnp.tanh(
        jnp.dot(x, w1_ref[...], preferred_element_type=jnp.float32) + b1_ref[...]
    )
    h2 = jnp.tanh(
        jnp.dot(h1, w2_ref[...], preferred_element_type=jnp.float32) + b2_ref[...]
    )
    out = jnp.dot(h2, w3_ref[...], preferred_element_type=jnp.float32) + b3_ref[...]
    o_ref[...] = out.astype(o_ref.dtype)


def _resident(shape):
    # Constant block index -> fetched once, stays resident in VMEM across the grid.
    return pl.BlockSpec(shape, lambda i: (0,) * len(shape))


def netg_forward(x, params, *, bm=2048):
    """x: (B, nz) float32. params: (in, out) weights and (1, out) biases."""
    w1, b1 = params["w1"], params["b1"]
    w2, b2 = params["w2"], params["b2"]
    w3, b3 = params["w3"], params["b3"]

    B, nz = x.shape
    ngf = w1.shape[1]
    out_dim = w3.shape[1]  # 2

    # ---- Batch-tile selection (no padding of x) -----------------------------
    # * If the whole batch fits one tile, use a single full-array block
    #   (leading block dim == full dim, so any B is legal).
    # * If B is large enough, make sure the grid has >= 2 steps so both v7x
    #   TensorCores get work ("parallel" axis); harmless on v5e/v6e.
    # * Otherwise tile by bm; the ragged last block is handled by Pallas
    #   (OOB input rows are garbage, OOB output rows are dropped).
    _SPLIT_MIN = 1024
    bm_eff = min(bm, B)
    if B > _SPLIT_MIN and pl.cdiv(B, bm_eff) < 2:
        bm_eff = pl.cdiv(B, 2)
    if bm_eff != B:
        bm_eff = _round_up(bm_eff, 8)  # sublane multiple when not full-dim
    grid = (pl.cdiv(B, bm_eff),)

    # ---- Cost estimate (true work, not padded work) --------------------------
    flops = 2 * B * (nz * ngf + ngf * ngf + ngf * out_dim)
    transcendentals = 2 * B * ngf  # two tanh layers
    param_bytes = sum(
        int(p.size) * p.dtype.itemsize for p in (w1, b1, w2, b2, w3, b3)
    )
    bytes_accessed = (
        int(x.size) * x.dtype.itemsize + B * out_dim * 4 + param_bytes
    )
    cost = pl.CostEstimate(
        flops=flops, transcendentals=transcendentals, bytes_accessed=bytes_accessed
    )

    out = pl.pallas_call(
        _netg_kernel,
        out_shape=jax.ShapeDtypeStruct((B, out_dim), jnp.float32),
        grid=grid,
        in_specs=[
            pl.BlockSpec((bm_eff, nz), lambda i: (i, 0)),  # streamed x tile
            _resident(w1.shape), _resident(b1.shape),
            _resident(w2.shape), _resident(b2.shape),
            _resident(w3.shape), _resident(b3.shape),
        ],
        out_specs=pl.BlockSpec((bm_eff, out_dim), lambda i: (i, 0)),
        compiler_params=pltpu.CompilerParams(
            dimension_semantics=("parallel",),     # shard batch across TCs on v7x
            vmem_limit_bytes=32 * 1024 * 1024,     # headroom over v5e's 16 MiB default
        ),
        cost_estimate=cost,
    )(x, w1, b1, w2, b2, w3, b3)
    return out


def init_params(key, nz, ngf):
    """Deterministic init mimicking PyTorch nn.Linear default
    (U[-1/sqrt(fan_in), +1/sqrt(fan_in)]). Weights stored as (in, out)."""
    ks = jax.random.split(key, 6)

    def linear(kw, kb, fan_in, fan_out):
        bound = 1.0 / jnp.sqrt(jnp.float32(fan_in))
        w = jax.random.uniform(kw, (fan_in, fan_out), jnp.float32, -bound, bound)
        b = jax.random.uniform(kb, (1, fan_out), jnp.float32, -bound, bound)
        return w, b

    w1, b1 = linear(ks[0], ks[1], nz, ngf)
    w2, b2 = linear(ks[2], ks[3], ngf, ngf)
    w3, b3 = linear(ks[4], ks[5], ngf, 2)
    return {"w1": w1, "b1": b1, "w2": w2, "b2": b2, "w3": w3, "b3": b3}


def reference_forward(x, params):
    h1 = jnp.tanh(x @ params["w1"] + params["b1"])
    h2 = jnp.tanh(h1 @ params["w2"] + params["b2"])
    return h2 @ params["w3"] + params["b3"]


if __name__ == "__main__":
    nz, ngf = 8, 32
    key = jax.random.PRNGKey(0)
    kp, kx1, kx2 = jax.random.split(key, 3)
    params = init_params(kp, nz, ngf)

    # 1) Small batch: single block equal to the full array.
    x1 = jax.random.normal(kx1, (8, nz), jnp.float32)
    o1 = jax.block_until_ready(netg_forward(x1, params))
    r1 = reference_forward(x1, params)
    assert o1.shape == (8, 2)
    assert jnp.allclose(o1, r1, atol=1e-5, rtol=1e-5)

    # 2) Ragged multi-step grid, no wrapper padding: B=600 with bm=256
    #    -> grid=(3,), last block has 88 real rows (OOB rows dropped on store).
    x2 = jax.random.normal(kx2, (600, nz), jnp.float32)
    o2 = jax.block_until_ready(netg_forward(x2, params, bm=256))
    r2 = reference_forward(x2, params)
    assert o2.shape == (600, 2)
    assert jnp.allclose(o2, r2, atol=1e-5, rtol=1e-5)

    # 3) Default large-tile path: whole batch in one block.
    o3 = jax.block_until_ready(netg_forward(x2, params))
    assert o3.shape == (600, 2)
    assert jnp.allclose(o3, r2, atol=1e-5, rtol=1e-5)

    print("KERNEL_OK")
</pallas_src>

<mosaic_0001>
module attributes {stable_mosaic.version = 11 : i64} {
  func.func @_netg_kernel(%arg0: i32, %arg1: memref<8x8xf32, #tpu.memory_space<vmem>>, %arg2: memref<8x32xf32, #tpu.memory_space<vmem>>, %arg3: memref<1x32xf32, #tpu.memory_space<vmem>>, %arg4: memref<32x32xf32, #tpu.memory_space<vmem>>, %arg5: memref<1x32xf32, #tpu.memory_space<vmem>>, %arg6: memref<32x2xf32, #tpu.memory_space<vmem>>, %arg7: memref<1x2xf32, #tpu.memory_space<vmem>>, %arg8: memref<8x2xf32, #tpu.memory_space<vmem>>) attributes {dimension_semantics = [#tpu.dimension_semantics<parallel>], iteration_bounds = array<i64: 1>, scalar_prefetch = 0 : i64, scratch_operands = 0 : i64, tpu.core_type = #tpu.core_type<tc>, window_params = [{transform_indices = @transform_0, window_bounds = array<i64: 8, 8>}, {pipeline_mode = #tpu.pipeline_mode<synchronous>, transform_indices = @transform_1, window_bounds = array<i64: 8, 32>}, {pipeline_mode = #tpu.pipeline_mode<synchronous>, transform_indices = @transform_2, window_bounds = array<i64: 1, 32>}, {pipeline_mode = #tpu.pipeline_mode<synchronous>, transform_indices = @transform_3, window_bounds = array<i64: 32, 32>}, {pipeline_mode = #tpu.pipeline_mode<synchronous>, transform_indices = @transform_4, window_bounds = array<i64: 1, 32>}, {pipeline_mode = #tpu.pipeline_mode<synchronous>, transform_indices = @transform_5, window_bounds = array<i64: 32, 2>}, {pipeline_mode = #tpu.pipeline_mode<synchronous>, transform_indices = @transform_6, window_bounds = array<i64: 1, 2>}, {transform_indices = @transform_7, window_bounds = array<i64: 8, 2>}]} {
    %c0 = arith.constant 0 : index
    %c0_0 = arith.constant 0 : index
    %0 = vector.load %arg1[%c0, %c0_0] : memref<8x8xf32, #tpu.memory_space<vmem>>, vector<8x8xf32>
    %c0_1 = arith.constant 0 : index
    %c0_2 = arith.constant 0 : index
    %1 = vector.load %arg2[%c0_1, %c0_2] : memref<8x32xf32, #tpu.memory_space<vmem>>, vector<8x32xf32>
    %cst = arith.constant dense<0.000000e+00> : vector<8x32xf32>
    %2 = tpu.matmul %0, %1, %cst {dimension_numbers = #tpu.dot_dimension_numbers<[1], [0], [0], [1], [0, 0, 1, 1], [], []>} : vector<8x8xf32>, vector<8x32xf32>, vector<8x32xf32> -> vector<8x32xf32>
    %c0_3 = arith.constant 0 : index
    %c0_4 = arith.constant 0 : index
    %3 = vector.load %arg3[%c0_3, %c0_4] : memref<1x32xf32, #tpu.memory_space<vmem>>, vector<1x32xf32>
    %4 = vector.broadcast %3 : vector<1x32xf32> to vector<8x32xf32>
    %5 = arith.addf %2, %4 : vector<8x32xf32>
    %6 = math.tanh %5 : vector<8x32xf32>
    %c0_5 = arith.constant 0 : index
    %c0_6 = arith.constant 0 : index
    %7 = vector.load %arg4[%c0_5, %c0_6] : memref<32x32xf32, #tpu.memory_space<vmem>>, vector<32x32xf32>
    %cst_7 = arith.constant dense<0.000000e+00> : vector<8x32xf32>
    %8 = tpu.matmul %6, %7, %cst_7 {dimension_numbers = #tpu.dot_dimension_numbers<[1], [0], [0], [1], [0, 0, 1, 1], [], []>} : vector<8x32xf32>, vector<32x32xf32>, vector<8x32xf32> -> vector<8x32xf32>
    %c0_8 = arith.constant 0 : index
    %c0_9 = arith.constant 0 : index
    %9 = vector.load %arg5[%c0_8, %c0_9] : memref<1x32xf32, #tpu.memory_space<vmem>>, vector<1x32xf32>
    %10 = vector.broadcast %9 : vector<1x32xf32> to vector<8x32xf32>
    %11 = arith.addf %8, %10 : vector<8x32xf32>
    %12 = math.tanh %11 : vector<8x32xf32>
    %c0_10 = arith.constant 0 : index
    %c0_11 = arith.constant 0 : index
    %13 = vector.load %arg6[%c0_10, %c0_11] : memref<32x2xf32, #tpu.memory_space<vmem>>, vector<32x2xf32>
    %cst_12 = arith.constant dense<0.000000e+00> : vector<8x2xf32>
    %14 = tpu.matmul %12, %13, %cst_12 {dimension_numbers = #tpu.dot_dimension_numbers<[1], [0], [0], [1], [0, 0, 1, 1], [], []>} : vector<8x32xf32>, vector<32x2xf32>, vector<8x2xf32> -> vector<8x2xf32>
    %c0_13 = arith.constant 0 : index
    %c0_14 = arith.constant 0 : index
    %15 = vector.load %arg7[%c0_13, %c0_14] : memref<1x2xf32, #tpu.memory_space<vmem>>, vector<1x2xf32>
    %16 = vector.broadcast %15 : vector<1x2xf32> to vector<8x2xf32>
    %17 = arith.addf %14, %16 : vector<8x2xf32>
    %c0_15 = arith.constant 0 : index
    %c0_16 = arith.constant 0 : index
    %18 = vector.load %arg8[%c0_15, %c0_16] : memref<8x2xf32, #tpu.memory_space<vmem>>, vector<8x2xf32>
    tpu.vector_store %arg8[%c0_15, %c0_16], %17 {strides = array<i32>} : memref<8x2xf32, #tpu.memory_space<vmem>>, vector<8x2xf32>,
    return
  }
  func.func @transform_0(%arg0: i32) -> (i32, i32) {
    %c0_i32 = arith.constant 0 : i32
    %c0_i32_0 = arith.constant 0 : i32
    return %arg0, %c0_i32 : i32, i32
  }
  func.func @transform_1(%arg0: i32) -> (i32, i32) {
    %c0_i32 = arith.constant 0 : i32
    %c0_i32_0 = arith.constant 0 : i32
    %c0_i32_1 = arith.constant 0 : i32
    return %c0_i32, %c0_i32_0 : i32, i32
  }
  func.func @transform_2(%arg0: i32) -> (i32, i32) {
    %c0_i32 = arith.constant 0 : i32
    %c0_i32_0 = arith.constant 0 : i32
    %c0_i32_1 = arith.constant 0 : i32
    return %c0_i32, %c0_i32_0 : i32, i32
  }
  func.func @transform_3(%arg0: i32) -> (i32, i32) {
    %c0_i32 = arith.constant 0 : i32
    %c0_i32_0 = arith.constant 0 : i32
    %c0_i32_1 = arith.constant 0 : i32
    return %c0_i32, %c0_i32_0 : i32, i32
  }
  func.func @transform_4(%arg0: i32) -> (i32, i32) {
    %c0_i32 = arith.constant 0 : i32
    %c0_i32_0 = arith.constant 0 : i32
    %c0_i32_1 = arith.constant 0 : i32
    return %c0_i32, %c0_i32_0 : i32, i32
  }
  func.func @transform_5(%arg0: i32) -> (i32, i32) {
    %c0_i32 = arith.constant 0 : i32
    %c0_i32_0 = arith.constant 0 : i32
    %c0_i32_1 = arith.constant 0 : i32
    return %c0_i32, %c0_i32_0 : i32, i32
  }
  func.func @transform_6(%arg0: i32) -> (i32, i32) {
    %c0_i32 = arith.constant 0 : i32
    %c0_i32_0 = arith.constant 0 : i32
    %c0_i32_1 = arith.constant 0 : i32
    return %c0_i32, %c0_i32_0 : i32, i32
  }
  func.func @transform_7(%arg0: i32) -> (i32, i32) {
    %c0_i32 = arith.constant 0 : i32
    %c0_i32_0 = arith.constant 0 : i32
    return %arg0, %c0_i32 : i32, i32
  }
}

</mosaic_0001>

<llo_original>
// kernel: tpu_custom_call.1
$region0: #{tpu_custom_call.1}
  #allocation0 [shape = 'u32[]', space=smem, size = 0x4, offset = 0x4, fixed_abs, tag = 'smem constant byte address 0x4 - core index']
  #allocation1 [shape = 'u32[72,128]{1,0:T(1,128)}', space=vmem, size = 0x9000, scoped, tag = 'internal scratch']
  %s0 = inlined_call_operand.hbm [shape: f32[8,8], index: 0, kind: input, shape index: {}]
  %s1 = inlined_call_operand.hbm [shape: f32[8,32], index: 1, kind: input, shape index: {}]
  %s2 = inlined_call_operand.vmem [shape: f32[1,32], index: 2, kind: input, shape index: {}]
  %s3 = inlined_call_operand.vmem [shape: f32[32,32], index: 3, kind: input, shape index: {}]
  %s4 = inlined_call_operand.vmem [shape: f32[1,32], index: 4, kind: input, shape index: {}]
  %s5 = inlined_call_operand.vmem [shape: f32[32,2], index: 5, kind: input, shape index: {}]
  %s6 = inlined_call_operand.vmem [shape: f32[1,2], index: 6, kind: input, shape index: {}]
  %s7 = inlined_call_operand.vmem [shape: f32[8,2], index: 7, kind: output, shape index: {}]
  %s8 = sld [smem:[#allocation0]]
  $region46: #{tpu_custom_call.1} parent=0
    _
  %s10 = ssub.s32 1, %s8
  %s11 = scalar_select 0, %s10, %s8
  $region1: #{tpu_custom_call.1} parent=0
    #allocation2 [shape = 'u8[4096]{0}', space=vmem, size = 0x1000, scoped, tag = 'input window, operand 0, single buffered']
    #allocation3 [shape = 's32[1]{0}', space=sflag, size = 0x4, scoped, tag = 'scoped memory for tpu_custom_call.1']
    #allocation4 [shape = 'u8[4096]{0}', space=vmem, size = 0x1000, scoped, tag = 'input window, operand 1, single buffered']
    #allocation5 [shape = 's32[1]{0}', space=sflag, size = 0x4, scoped, tag = 'scoped memory for tpu_custom_call.1']
    %12 = vsyncpa [#allocation3], 0
    %13 = vsyncpa [#allocation5], 0
    // Predicated region
    $region2: #{tpu_custom_call.1} parent=1 // pred_check
      _
    $region3: #{tpu_custom_call.1} parent=1 // pred_check_branch
      %15 = sbr.rel (0) target = $region5
    $region4: #{tpu_custom_call.1} parent=1 // pred_region
      %17 = vsyncadd [#allocation3], 0
      %s19 = sshll.u32 %s0, 4
      %s20 = int_to_ptr.hbm [resolvable:$true] %s19
      %s21 = sshll.u32 [#allocation2], 4
      %s22 = int_to_ptr.vmem [resolvable:$true] %s21
      %24 = dma.hbm_to_vmem [thread:$0]  %s20, 128, %s22, [#allocation3]
    $region5: #{tpu_custom_call.1} parent=1 // pred_fallthru
      _
    // Predicated region
    $region6: #{tpu_custom_call.1} parent=1 // pred_check
      _
    $region7: #{tpu_custom_call.1} parent=1 // pred_check_branch
      %26 = sbr.rel (0) target = $region9
    $region8: #{tpu_custom_call.1} parent=1 // pred_region
      %28 = vsyncadd [#allocation5], 0
      %s30 = sshll.u32 %s1, 4
      %s31 = int_to_ptr.hbm [resolvable:$true] %s30
      %s32 = sshll.u32 [#allocation4], 4
      %s33 = int_to_ptr.vmem [resolvable:$true] %s32
      %35 = dma.hbm_to_vmem [thread:$0]  %s31, 128, %s33, [#allocation5]
    $region9: #{tpu_custom_call.1} parent=1 // pred_fallthru
      _
    // Predicated region
    $region10: #{tpu_custom_call.1} parent=1 // pred_check
      _
    $region11: #{tpu_custom_call.1} parent=1 // pred_check_branch
      %37 = sbr.rel (0) target = $region13
    $region12: #{tpu_custom_call.1} parent=1 // pred_region
      _
    $region13: #{tpu_custom_call.1} parent=1 // pred_fallthru
      _
    // Predicated region
    $region14: #{tpu_custom_call.1} parent=1 // pred_check
      _
    $region15: #{tpu_custom_call.1} parent=1 // pred_check_branch
      %39 = sbr.rel (0) target = $region17
    $region16: #{tpu_custom_call.1} parent=1 // pred_region
      _
    $region17: #{tpu_custom_call.1} parent=1 // pred_fallthru
      _
    // Predicated region
    $region18: #{tpu_custom_call.1} parent=1 // pred_check
      _
    $region19: #{tpu_custom_call.1} parent=1 // pred_check_branch
      %41 = sbr.rel (0) target = $region21
    $region20: #{tpu_custom_call.1} parent=1 // pred_region
      _
    $region21: #{tpu_custom_call.1} parent=1 // pred_fallthru
      _
    // Predicated region
    $region22: #{tpu_custom_call.1} parent=1 // pred_check
      _
    $region23: #{tpu_custom_call.1} parent=1 // pred_check_branch
      %43 = sbr.rel (0) target = $region25
    $region24: #{tpu_custom_call.1} parent=1 // pred_region
      _
    $region25: #{tpu_custom_call.1} parent=1 // pred_fallthru
      _
    // Predicated region
    $region26: #{tpu_custom_call.1} parent=1 // pred_check
      _
    $region27: #{tpu_custom_call.1} parent=1 // pred_check_branch
      %45 = sbr.rel (0) target = $region29
    $region28: #{tpu_custom_call.1} parent=1 // pred_region
      _
    $region29: #{tpu_custom_call.1} parent=1 // pred_fallthru
      _
    // Predicated region
    $region30: #{tpu_custom_call.1} parent=1 // pred_check
      _
    $region31: #{tpu_custom_call.1} parent=1 // pred_check_branch
      %47 = sbr.rel (0) target = $region33
    $region32: #{tpu_custom_call.1} parent=1 // pred_region
      %49 = dma.done [#allocation3], 128
    $region33: #{tpu_custom_call.1} parent=1 // pred_fallthru
      _
    // Predicated region
    $region34: #{tpu_custom_call.1} parent=1 // pred_check
      _
    $region35: #{tpu_custom_call.1} parent=1 // pred_check_branch
      %51 = sbr.rel (0) target = $region37
    $region36: #{tpu_custom_call.1} parent=1 // pred_region
      %53 = dma.done [#allocation5], 128
    $region37: #{tpu_custom_call.1} parent=1 // pred_fallthru
      _
    %v54 = vld [vmem:[#allocation2] sm:$0xff]
    %v55 = vld [vmem:[#allocation4] sm:$0xff]
    %v56 = vld [vmem:[%s2] sm:$0x1]
    %v58 = vperm.slane %v56, 0
    %vm60 = vcmask 64512
    %v62 = vsel %vm60, %v54, 0
    %64 = vmatpush.msra.mxu0 0.0
    %65 = vmatpush.msra.mxu0 0.0
    %66 = vmatpush.msra.mxu0 0.0
    %67 = vmatpush.msra.mxu0 0.0
    %68 = vmatpush.msra.mxu0 0.0
    %69 = vmatpush.msra.mxu0 0.0
    %70 = vmatpush.msra.mxu0 0.0
    %71 = vmatpush.msra.mxu0 0.0
    %72 = vmatpush.msra.mxu0 0.0
    %73 = vmatpush.msra.mxu0 0.0
    %74 = vmatpush.msra.mxu0 0.0
    %75 = vmatpush.msra.mxu0 0.0
    %76 = vmatpush.msra.mxu0 0.0
    %77 = vmatpush.msra.mxu0 0.0
    %78 = vmatpush.msra.mxu0 0.0
    %79 = vmatpush.msra.mxu0 %v55
    %80 = vmatmul.f32.gmra.mxu0 %v62
    %v81 = vpop.f32.mrf.mxu0
    %v82 = vadd.f32 %v58, %v81
    %83 = vdwg.mxu0
    %v84 = vtanh.pop %v82
    %v85 = vld [vmem:[%s3] sm:$0xff]
    %v86 = vld [vmem:[%s3 + $0x8] sm:$0xff]
    %v87 = vld [vmem:[%s3 + $0x10] sm:$0xff]
    %v88 = vld [vmem:[%s3 + $0x18] sm:$0xff]
    %v89 = vld [vmem:[%s4] sm:$0x1]
    %v91 = vperm.slane %v89, 0
    %vm93 = vcmask 261120
    %v95 = vsel %vm93, %v84, 0
    %97 = vmatpush.msra.mxu0 0.0
    %98 = vmatpush.msra.mxu0 0.0
    %99 = vmatpush.msra.mxu0 0.0
    %100 = vmatpush.msra.mxu0 0.0
    %101 = vmatpush.msra.mxu0 0.0
    %102 = vmatpush.msra.mxu0 0.0
    %103 = vmatpush.msra.mxu0 0.0
    %104 = vmatpush.msra.mxu0 0.0
    %105 = vmatpush.msra.mxu0 0.0
    %106 = vmatpush.msra.mxu0 0.0
    %107 = vmatpush.msra.mxu0 0.0
    %108 = vmatpush.msra.mxu0 0.0
    %109 = vmatpush.msra.mxu0 %v88
    %110 = vmatpush.msra.mxu0 %v87
    %111 = vmatpush.msra.mxu0 %v86
    %112 = vmatpush.msra.mxu0 %v85
    %113 = vmatmul.f32.gmra.mxu0 %v95
    %v114 = vpop.f32.mrf.mxu0
    %v115 = vadd.f32 %v91, %v114
    %116 = vdwg.mxu0
    %v117 = vtanh.pop %v115
    %v118 = vld [vmem:[%s5] sm:$0xff]
    %v119 = vld [vmem:[%s5 + $0x8] sm:$0xff]
    %v120 = vld [vmem:[%s5 + $0x10] sm:$0xff]
    %v121 = vld [vmem:[%s5 + $0x18] sm:$0xff]
    %v122 = vld [vmem:[%s6] sm:$0x1]
    %v124 = vperm.slane %v122, 0
    %v127 = vsel %vm93, %v117, 0
    %129 = vmatpush.msra.mxu0 0.0
    %130 = vmatpush.msra.mxu0 0.0
    %131 = vmatpush.msra.mxu0 0.0
    %132 = vmatpush.msra.mxu0 0.0
    %133 = vmatpush.msra.mxu0 0.0
    %134 = vmatpush.msra.mxu0 0.0
    %135 = vmatpush.msra.mxu0 0.0
    %136 = vmatpush.msra.mxu0 0.0
    %137 = vmatpush.msra.mxu0 0.0
    %138 = vmatpush.msra.mxu0 0.0
    %139 = vmatpush.msra.mxu0 0.0
    %140 = vmatpush.msra.mxu0 0.0
    %141 = vmatpush.msra.mxu0 %v121
    %142 = vmatpush.msra.mxu0 %v120
    %143 = vmatpush.msra.mxu0 %v119
    %144 = vmatpush.msra.mxu0 %v118
    %145 = vmatmul.f32.gmra.mxu0 %v127
    %v146 = vpop.f32.mrf.mxu0
    %v147 = vadd.f32 %v124, %v146
    %148 = vdwg.mxu0
    %vm149 = vcmask 15360
    %150 = vst.msk [vmem:[%s7] sm:$0xff] %vm149, %v147
    // Predicated region
    $region38: #{tpu_custom_call.1} parent=1 // pred_check
      _
    $region39: #{tpu_custom_call.1} parent=1 // pred_check_branch
      %152 = sbr.rel (0) target = $region41
    $region40: #{tpu_custom_call.1} parent=1 // pred_region
      _
    $region41: #{tpu_custom_call.1} parent=1 // pred_fallthru
      _
    // Predicated region
    $region42: #{tpu_custom_call.1} parent=1 // pred_check
      _
    $region43: #{tpu_custom_call.1} parent=1 // pred_check_branch
      %154 = sbr.rel (0) target = $region45
    $region44: #{tpu_custom_call.1} parent=1 // pred_region
      _
    $region45: #{tpu_custom_call.1} parent=1 // pred_fallthru
      _
    %155 = vsyncpa [#allocation3], 1
    %156 = vsyncpa [#allocation5], 1

</llo_original>
